<compile_context>
chip_gen: v7x
topology: tpu7x:2x2x1
jax: 0.10.0
libtpu: 0.0.40
codegen_flags: <defaults>
</compile_context>

<pallas_src>
import numpy as np
import jax
import jax.numpy as jnp
from jax.experimental import pallas as pl
from jax.experimental.pallas import tpu as pltpu

# ------------------------- static module configuration -------------------------
OSHAPE = 4                                      # action_space
PHASE_PAIRS = [[0, 4], [1, 5], [2, 6], [3, 7]]  # phase -> movements
NUM_MOVEMENTS = 8
DS = 1                                          # demand_shape
ONE_HOT = False
COMP_MASK = np.array([[(i + j) % 2 for j in range(OSHAPE - 1)]
                      for i in range(OSHAPE)], dtype=np.int32)   # (oshape, oshape-1)
NR = OSHAPE * (OSHAPE - 1)

D_OUT = 4
P_OUT = 4
LANE_EMBED = 16
REL_EMBED = 4
CONV_CH = 20

M = NUM_MOVEMENTS
ML = M * LANE_EMBED          # 128 lanes: movement x lane-embed
MD = M * D_OUT               # 32  lanes: movement x demand-embed
LR = 256                     # NR * CONV_CH = 240, padded to 2 full vregs
R_WLED = 0                   # row offsets inside the packed weight slab
R_WLANE = R_WLED + MD        # 32
R_WHID = R_WLANE + ML        # 160
R_WQ = R_WHID + LR           # 416
R_TOTAL = R_WQ + LR          # 672


# --------------------------------- Pallas kernel --------------------------------
def frap_kernel(acts_ref, dem_ref, vecs_ref, mats_ref, q_ref):
    f32 = jnp.float32
    base    = vecs_ref[0:1, 0:ML]      # tile(sigmoid(p0) @ Wle_p + ble)
    phidiff = vecs_ref[1:2, 0:ML]      # tile((sigmoid(p1) - sigmoid(p0)) @ Wle_p)
    wd      = vecs_ref[2:3, 0:MD]      # tile(Wd row)      (demand_shape == 1)
    bd      = vecs_ref[3:4, 0:MD]      # tile(bd)
    blc     = vecs_ref[4:5, :]         # tile(lane_conv bias)
    relb    = vecs_ref[5:6, :]         # precomputed relation branch (flattened)
    bhid    = vecs_ref[6:7, :]         # tile(hidden-layer bias)
    qb      = vecs_ref[7:8, 0:OSHAPE]  # (oshape - 1) * before_merge bias

    acts = acts_ref[...]               # (TB, 128) 0/1 indicator, repeated per embed lane
    dem  = dem_ref[...]                # (TB, 32)  raw demand, repeated per embed lane

    # demand linear (K=1 -> VPU broadcast-mul) + sigmoid (EUP)
    dsig = jax.nn.sigmoid(dem * wd + bd)                                     # (TB, 32)

    # lane_embedding: phase term is affine in the 0/1 act indicator (VPU);
    # demand term is one block-diagonal MXU matmul.  relu on the VPU.
    pd = jnp.maximum(
        base + acts * phidiff
        + jnp.dot(dsig, mats_ref[R_WLED:R_WLED + MD, 0:ML],
                  preferred_element_type=f32), 0.0)                          # (TB, 128)

    # phase-pair averaging + rotated (i != j) gather + lane_conv, all folded
    # into one static (128, 240) matrix built in the wrapper.
    lane = jnp.maximum(
        jnp.dot(pd, mats_ref[R_WLANE:R_WLANE + ML, :],
                preferred_element_type=f32) + blc, 0.0)                      # (TB, 256)

    # combine with the (input-independent, precomputed) relation branch.
    comb = lane * relb

    # hidden 1x1 conv (block-diagonal over the NR positions) + relu
    hid = jnp.maximum(
        jnp.dot(comb, mats_ref[R_WHID:R_WHID + LR, :],
                preferred_element_type=f32) + bhid, 0.0)                     # (TB, 256)

    # before_merge 1x1 conv + sum over (oshape-1), folded into one (240, 4) matrix.
    q_ref[...] = jnp.dot(hid, mats_ref[R_WQ:R_WQ + LR, 0:OSHAPE],
                         preferred_element_type=f32) + qb                    # (TB, 4)


# ------------------------------ static selectors --------------------------------
def _rotation_selectors():
    rot = [(i, j) for i in range(OSHAPE) for j in range(OSHAPE) if i != j]
    a_left = np.zeros((NR, M), np.float32)
    a_right = np.zeros((NR, M), np.float32)
    for r, (i, j) in enumerate(rot):
        for mv in PHASE_PAIRS[i]:
            a_left[r, mv] += 1.0 / len(PHASE_PAIRS[i])
        for mv in PHASE_PAIRS[j]:
            a_right[r, mv] += 1.0 / len(PHASE_PAIRS[j])
    group = np.zeros((NR, OSHAPE), np.float32)
    for r in range(NR):
        group[r, r // (OSHAPE - 1)] = 1.0
    return a_left, a_right, group


# -------------------------- parameter packing (per call) ------------------------
def _pack_params(params):
    f32 = jnp.float32
    a_left, a_right, group = _rotation_selectors()

    wlep, wled = params['Wle'][:P_OUT], params['Wle'][P_OUT:]             # (4,16)
    wlca, wlcb = params['Wlc'][:LANE_EMBED], params['Wlc'][LANE_EMBED:]   # (16,20)

    # phase embedding is binary -> fold sigmoid(p_table) @ Wle_p into two rows
    phi0 = jax.nn.sigmoid(params['p_table'][0]) @ wlep                    # (16,)
    phi1 = jax.nn.sigmoid(params['p_table'][1]) @ wlep

    # relation branch is input independent -> hoisted out of the kernel
    rel_e = jnp.maximum(params['e_table'][jnp.asarray(COMP_MASK.reshape(-1))], 0.0)
    rel = jnp.maximum(rel_e @ params['Wrc'] + params['brc'], 0.0)         # (NR, 20)

    # block-diagonal / Kronecker folded weights
    wled_bd = jnp.einsum('mn,kc->mknc', jnp.eye(M, dtype=f32), wled
                         ).reshape(MD, ML)                                # (32, 128)
    w_lane = (jnp.einsum('rm,co->mcro', jnp.asarray(a_left), wlca)
              + jnp.einsum('rm,co->mcro', jnp.asarray(a_right), wlcb)
              ).reshape(ML, NR * CONV_CH)                                 # (128, 240)
    whid_bd = jnp.einsum('rs,co->rcso', jnp.eye(NR, dtype=f32), params['Whid']
                         ).reshape(NR * CONV_CH, NR * CONV_CH)            # (240, 240)
    wq = jnp.einsum('ro,c->rco', jnp.asarray(group), params['Wbm'][:, 0]
                    ).reshape(NR * CONV_CH, OSHAPE)                       # (240, 4)

    mats = jnp.zeros((R_TOTAL, LR), f32)
    mats = mats.at[R_WLED:R_WLED + MD, 0:ML].set(wled_bd)
    mats = mats.at[R_WLANE:R_WLANE + ML, 0:NR * CONV_CH].set(w_lane)
    mats = mats.at[R_WHID:R_WHID + NR * CONV_CH, 0:NR * CONV_CH].set(whid_bd)
    mats = mats.at[R_WQ:R_WQ + NR * CONV_CH, 0:OSHAPE].set(wq)

    # TODO(synk): demand_shape > 1 would need a block-diagonal Wd matmul; DS == 1 here.
    vecs = jnp.zeros((8, LR), f32)
    vecs = vecs.at[0, 0:ML].set(jnp.tile(phi0 + params['ble'][0], M))
    vecs = vecs.at[1, 0:ML].set(jnp.tile(phi1 - phi0, M))
    vecs = vecs.at[2, 0:MD].set(jnp.tile(params['Wd'][0], M))
    vecs = vecs.at[3, 0:MD].set(jnp.tile(params['bd'][0], M))
    vecs = vecs.at[4, 0:NR * CONV_CH].set(jnp.tile(params['blc'][0], NR))
    vecs = vecs.at[5, 0:NR * CONV_CH].set(rel.reshape(-1))
    vecs = vecs.at[6, 0:NR * CONV_CH].set(jnp.tile(params['bhid'][0], NR))
    vecs = vecs.at[7, 0:OSHAPE].set((OSHAPE - 1) * params['bbm'][0, 0])
    return vecs, mats


# --------------------------------- glue / wrapper --------------------------------
def init_params(key):
    keys = jax.random.split(key, 14)

    def w(k, shape, scale=0.3):
        return jax.random.normal(k, shape, jnp.float32) * scale

    return dict(
        p_table=w(keys[0], (2, P_OUT)),
        Wd=w(keys[1], (DS, D_OUT)), bd=w(keys[2], (1, D_OUT)),
        Wle=w(keys[3], (P_OUT + D_OUT, LANE_EMBED)), ble=w(keys[4], (1, LANE_EMBED)),
        Wlc=w(keys[5], (2 * LANE_EMBED, CONV_CH)), blc=w(keys[6], (1, CONV_CH)),
        e_table=w(keys[7], (2, REL_EMBED)),
        Wrc=w(keys[8], (REL_EMBED, CONV_CH)), brc=w(keys[9], (1, CONV_CH)),
        Whid=w(keys[10], (CONV_CH, CONV_CH)), bhid=w(keys[11], (1, CONV_CH)),
        Wbm=w(keys[12], (CONV_CH, 1)), bbm=w(keys[13], (1, 1)),
    )


def frap_forward(states, params):
    """states: (B, 1 + NUM_MOVEMENTS*DS); column 0 is the action index."""
    B = states.shape[0]

    # TODO(synk): one_hot=True input branch is not built; only the action-index path.
    acts_idx = states[:, 0].astype(jnp.int32)
    pair_tbl = jnp.asarray(PHASE_PAIRS, jnp.int32)
    sel = pair_tbl[acts_idx]                                           # (B, pair_len)
    onehot = jnp.zeros((B, M), jnp.float32).at[
        jnp.arange(B)[:, None], sel].set(1.0)                          # (B, M)
    dem = states[:, 1:].astype(jnp.float32)                           # (B, M)   (DS == 1)

    # batch tiling: TB rows per grid step (multiple of 8 sublanes), batch padded.
    b8 = -(-B // 8) * 8
    TB = b8 if b8 <= 128 else 128
    b_pad = -(-B // TB) * TB
    if b_pad != B:
        onehot = jnp.pad(onehot, ((0, b_pad - B), (0, 0)))
        dem = jnp.pad(dem, ((0, b_pad - B), (0, 0)))

    acts_rep = jnp.repeat(onehot, LANE_EMBED, axis=1)                  # (b_pad, 128)
    dem_rep = jnp.repeat(dem, D_OUT, axis=1)                           # (b_pad, 32)

    vecs, mats = _pack_params(params)

    out = pl.pallas_call(
        frap_kernel,
        out_shape=jax.ShapeDtypeStruct((b_pad, OSHAPE), jnp.float32),
        grid=(b_pad // TB,),
        in_specs=[
            pl.BlockSpec((TB, ML), lambda i: (i, 0)),
            pl.BlockSpec((TB, MD), lambda i: (i, 0)),
            pl.BlockSpec((8, LR), lambda i: (0, 0)),
            pl.BlockSpec((R_TOTAL, LR), lambda i: (0, 0)),
        ],
        out_specs=pl.BlockSpec((TB, OSHAPE), lambda i: (i, 0)),
        compiler_params=pltpu.CompilerParams(
            dimension_semantics=("parallel",)),
    )(acts_rep, dem_rep, vecs, mats)

    return out[:B]


# -------------------------- pure numpy reference (PyTorch semantics) --------------------------
def frap_reference(states, P):
    def sigmoid(x):
        return 1.0 / (1.0 + np.exp(-x))

    B = states.shape[0]
    Mv = (states.shape[1] - 1) // DS
    acts = states[:, 0].astype(np.int64)
    st = states[:, 1:].astype(np.float32)

    ext = np.zeros((B, Mv), np.int64)
    for b in range(B):
        for idx in PHASE_PAIRS[acts[b]]:
            ext[b, idx] = 1

    pe = sigmoid(P['p_table'][ext])                                   # (B, M, 4)
    pds = []
    for i in range(Mv):
        demand = sigmoid(st[:, i:i + DS] @ P['Wd'] + P['bd'])         # (B, 4)
        pd = np.concatenate([pe[:, i], demand], -1)                   # (B, 8)
        pds.append(np.maximum(pd @ P['Wle'] + P['ble'], 0.0))
    pds = np.stack(pds, 1)                                            # (B, M, 16)

    pairs = []
    for pair in PHASE_PAIRS:
        cd = pds[:, pair[0]].copy()
        for idx in pair[1:]:
            cd = cd + pds[:, idx]
        pairs.append(cd / len(pair))

    rot = []
    for i in range(len(pairs)):
        for j in range(len(pairs)):
            if i != j:
                rot.append(np.concatenate([pairs[i], pairs[j]], -1))
    rot = np.stack(rot, 1)                                            # (B, NR, 32)

    lane = np.maximum(rot @ P['Wlc'] + P['blc'], 0.0)                 # (B, NR, 20)
    rel_e = np.maximum(P['e_table'][COMP_MASK.reshape(-1)], 0.0)      # (NR, 4)
    rel = np.maximum(rel_e @ P['Wrc'] + P['brc'], 0.0)                # (NR, 20)
    comb = lane * rel[None]
    hid = np.maximum(comb @ P['Whid'] + P['bhid'], 0.0)
    bm = hid @ P['Wbm'] + P['bbm']                                    # (B, NR, 1)
    return bm.reshape(B, OSHAPE, OSHAPE - 1).sum(-1)                  # (B, OSHAPE)


# --------------------------------------- main ---------------------------------------
if __name__ == "__main__":
    key = jax.random.PRNGKey(0)
    kp, ka, ks = jax.random.split(key, 3)

    params = init_params(kp)

    B = 2
    acts = jax.random.randint(ka, (B, 1), 0, OSHAPE).astype(jnp.float32)
    feats = jax.random.uniform(ks, (B, NUM_MOVEMENTS * DS), dtype=jnp.float32)
    states = jnp.concatenate([acts, feats], axis=1)                   # (B, 1 + M*DS)

    q = frap_forward(states, params)
    q = jax.block_until_ready(q)

    q_ref = frap_reference(np.asarray(states),
                           {k: np.asarray(v) for k, v in params.items()})
    np.testing.assert_allclose(np.asarray(q), q_ref, rtol=2e-3, atol=2e-3)

    print("KERNEL_OK")
</pallas_src>

<mosaic_0001>
module attributes {stable_mosaic.version = 11 : i64} {
  func.func @frap_kernel(%arg0: i32, %arg1: memref<8x128xf32, #tpu.memory_space<vmem>>, %arg2: memref<8x32xf32, #tpu.memory_space<vmem>>, %arg3: memref<8x256xf32, #tpu.memory_space<vmem>>, %arg4: memref<672x256xf32, #tpu.memory_space<vmem>>, %arg5: memref<8x4xf32, #tpu.memory_space<vmem>>) attributes {dimension_semantics = [#tpu.dimension_semantics<parallel>], iteration_bounds = array<i64: 1>, scalar_prefetch = 0 : i64, scratch_operands = 0 : i64, tpu.core_type = #tpu.core_type<tc>, window_params = [{transform_indices = @transform_0, window_bounds = array<i64: 8, 128>}, {transform_indices = @transform_1, window_bounds = array<i64: 8, 32>}, {pipeline_mode = #tpu.pipeline_mode<synchronous>, transform_indices = @transform_2, window_bounds = array<i64: 8, 256>}, {pipeline_mode = #tpu.pipeline_mode<synchronous>, transform_indices = @transform_3, window_bounds = array<i64: 672, 256>}, {transform_indices = @transform_4, window_bounds = array<i64: 8, 4>}]} {
    %c0 = arith.constant 0 : index
    %c0_0 = arith.constant 0 : index
    %0 = vector.load %arg3[%c0, %c0_0] : memref<8x256xf32, #tpu.memory_space<vmem>>, vector<1x128xf32>
    %c1 = arith.constant 1 : index
    %c0_1 = arith.constant 0 : index
    %1 = vector.load %arg3[%c1, %c0_1] : memref<8x256xf32, #tpu.memory_space<vmem>>, vector<1x128xf32>
    %c2 = arith.constant 2 : index
    %c0_2 = arith.constant 0 : index
    %2 = vector.load %arg3[%c2, %c0_2] : memref<8x256xf32, #tpu.memory_space<vmem>>, vector<1x32xf32>
    %c3 = arith.constant 3 : index
    %c0_3 = arith.constant 0 : index
    %3 = vector.load %arg3[%c3, %c0_3] : memref<8x256xf32, #tpu.memory_space<vmem>>, vector<1x32xf32>
    %c4 = arith.constant 4 : index
    %c0_4 = arith.constant 0 : index
    %4 = vector.load %arg3[%c4, %c0_4] : memref<8x256xf32, #tpu.memory_space<vmem>>, vector<1x256xf32>
    %c5 = arith.constant 5 : index
    %c0_5 = arith.constant 0 : index
    %5 = vector.load %arg3[%c5, %c0_5] : memref<8x256xf32, #tpu.memory_space<vmem>>, vector<1x256xf32>
    %c6 = arith.constant 6 : index
    %c0_6 = arith.constant 0 : index
    %6 = vector.load %arg3[%c6, %c0_6] : memref<8x256xf32, #tpu.memory_space<vmem>>, vector<1x256xf32>
    %c7 = arith.constant 7 : index
    %c0_7 = arith.constant 0 : index
    %7 = vector.load %arg3[%c7, %c0_7] : memref<8x256xf32, #tpu.memory_space<vmem>>, vector<1x4xf32>
    %c0_8 = arith.constant 0 : index
    %c0_9 = arith.constant 0 : index
    %8 = vector.load %arg1[%c0_8, %c0_9] : memref<8x128xf32, #tpu.memory_space<vmem>>, vector<8x128xf32>
    %c0_10 = arith.constant 0 : index
    %c0_11 = arith.constant 0 : index
    %9 = vector.load %arg2[%c0_10, %c0_11] : memref<8x32xf32, #tpu.memory_space<vmem>>, vector<8x32xf32>
    %10 = vector.broadcast %2 : vector<1x32xf32> to vector<8x32xf32>
    %11 = arith.mulf %9, %10 : vector<8x32xf32>
    %12 = vector.broadcast %3 : vector<1x32xf32> to vector<8x32xf32>
    %13 = arith.addf %11, %12 : vector<8x32xf32>
    %14 = arith.negf %13 : vector<8x32xf32>
    %15 = math.exp %14 : vector<8x32xf32>
    %cst = arith.constant 1.000000e+00 : f32
    %16 = vector.broadcast %cst : f32 to vector<8x32xf32>
    %17 = arith.addf %16, %15 : vector<8x32xf32>
    %18 = arith.divf %16, %17 : vector<8x32xf32>
    %19 = vector.broadcast %1 : vector<1x128xf32> to vector<8x128xf32>
    %20 = arith.mulf %8, %19 : vector<8x128xf32>
    %21 = vector.broadcast %0 : vector<1x128xf32> to vector<8x128xf32>
    %22 = arith.addf %21, %20 : vector<8x128xf32>
    %c0_12 = arith.constant 0 : index
    %c0_13 = arith.constant 0 : index
    %23 = vector.load %arg4[%c0_12, %c0_13] : memref<672x256xf32, #tpu.memory_space<vmem>>, vector<32x128xf32>
    %cst_14 = arith.constant dense<0.000000e+00> : vector<8x128xf32>
    %24 = tpu.matmul %18, %23, %cst_14 {dimension_numbers = #tpu.dot_dimension_numbers<[1], [0], [0], [1], [0, 0, 1, 1], [], []>} : vector<8x32xf32>, vector<32x128xf32>, vector<8x128xf32> -> vector<8x128xf32>
    %25 = arith.addf %22, %24 : vector<8x128xf32>
    %cst_15 = arith.constant 0.000000e+00 : f32
    %26 = vector.broadcast %cst_15 : f32 to vector<8x128xf32>
    %27 = arith.maximumf %25, %26 : vector<8x128xf32>
    %c32 = arith.constant 32 : index
    %c0_16 = arith.constant 0 : index
    %28 = vector.load %arg4[%c32, %c0_16] : memref<672x256xf32, #tpu.memory_space<vmem>>, vector<128x256xf32>
    %cst_17 = arith.constant dense<0.000000e+00> : vector<8x256xf32>
    %29 = tpu.matmul %27, %28, %cst_17 {dimension_numbers = #tpu.dot_dimension_numbers<[1], [0], [0], [1], [0, 0, 1, 1], [], []>} : vector<8x128xf32>, vector<128x256xf32>, vector<8x256xf32> -> vector<8x256xf32>
    %30 = vector.broadcast %4 : vector<1x256xf32> to vector<8x256xf32>
    %31 = arith.addf %29, %30 : vector<8x256xf32>
    %cst_18 = arith.constant 0.000000e+00 : f32
    %32 = vector.broadcast %cst_18 : f32 to vector<8x256xf32>
    %33 = arith.maximumf %31, %32 : vector<8x256xf32>
    %34 = vector.broadcast %5 : vector<1x256xf32> to vector<8x256xf32>
    %35 = arith.mulf %33, %34 : vector<8x256xf32>
    %c160 = arith.constant 160 : index
    %c0_19 = arith.constant 0 : index
    %36 = vector.load %arg4[%c160, %c0_19] : memref<672x256xf32, #tpu.memory_space<vmem>>, vector<256x256xf32>
    %cst_20 = arith.constant dense<0.000000e+00> : vector<8x256xf32>
    %37 = tpu.matmul %35, %36, %cst_20 {dimension_numbers = #tpu.dot_dimension_numbers<[1], [0], [0], [1], [0, 0, 1, 1], [], []>} : vector<8x256xf32>, vector<256x256xf32>, vector<8x256xf32> -> vector<8x256xf32>
    %38 = vector.broadcast %6 : vector<1x256xf32> to vector<8x256xf32>
    %39 = arith.addf %37, %38 : vector<8x256xf32>
    %cst_21 = arith.constant 0.000000e+00 : f32
    %40 = vector.broadcast %cst_21 : f32 to vector<8x256xf32>
    %41 = arith.maximumf %39, %40 : vector<8x256xf32>
    %c416 = arith.constant 416 : index
    %c0_22 = arith.constant 0 : index
    %42 = vector.load %arg4[%c416, %c0_22] : memref<672x256xf32, #tpu.memory_space<vmem>>, vector<256x4xf32>
    %cst_23 = arith.constant dense<0.000000e+00> : vector<8x4xf32>
    %43 = tpu.matmul %41, %42, %cst_23 {dimension_numbers = #tpu.dot_dimension_numbers<[1], [0], [0], [1], [0, 0, 1, 1], [], []>} : vector<8x256xf32>, vector<256x4xf32>, vector<8x4xf32> -> vector<8x4xf32>
    %44 = vector.broadcast %7 : vector<1x4xf32> to vector<8x4xf32>
    %45 = arith.addf %43, %44 : vector<8x4xf32>
    %c0_24 = arith.constant 0 : index
    %c0_25 = arith.constant 0 : index
    %46 = vector.load %arg5[%c0_24, %c0_25] : memref<8x4xf32, #tpu.memory_space<vmem>>, vector<8x4xf32>
    tpu.vector_store %arg5[%c0_24, %c0_25], %45 {strides = array<i32>} : memref<8x4xf32, #tpu.memory_space<vmem>>, vector<8x4xf32>,
    return
  }
  func.func @transform_0(%arg0: i32) -> (i32, i32) {
    %c0_i32 = arith.constant 0 : i32
    %c0_i32_0 = arith.constant 0 : i32
    return %arg0, %c0_i32 : i32, i32
  }
  func.func @transform_1(%arg0: i32) -> (i32, i32) {
    %c0_i32 = arith.constant 0 : i32
    %c0_i32_0 = arith.constant 0 : i32
    return %arg0, %c0_i32 : i32, i32
  }
  func.func @transform_2(%arg0: i32) -> (i32, i32) {
    %c0_i32 = arith.constant 0 : i32
    %c0_i32_0 = arith.constant 0 : i32
    %c0_i32_1 = arith.constant 0 : i32
    return %c0_i32, %c0_i32_0 : i32, i32
  }
  func.func @transform_3(%arg0: i32) -> (i32, i32) {
    %c0_i32 = arith.constant 0 : i32
    %c0_i32_0 = arith.constant 0 : i32
    %c0_i32_1 = arith.constant 0 : i32
    return %c0_i32, %c0_i32_0 : i32, i32
  }
  func.func @transform_4(%arg0: i32) -> (i32, i32) {
    %c0_i32 = arith.constant 0 : i32
    %c0_i32_0 = arith.constant 0 : i32
    return %arg0, %c0_i32 : i32, i32
  }
}

</mosaic_0001>

<llo_original>
// kernel: tpu_custom_call.1
$region0: #{tpu_custom_call.1}
  #allocation0 [shape = 'u32[]', space=smem, size = 0x4, offset = 0x4, fixed_abs, tag = 'smem constant byte address 0x4 - core index']
  #allocation1 [shape = 'u32[144,128]{1,0:T(1,128)}', space=vmem, size = 0x12000, scoped, tag = 'internal scratch']
  %s0 = inlined_call_operand.hbm [shape: f32[8,128], index: 0, kind: input, shape index: {}]
  %s1 = inlined_call_operand.hbm [shape: f32[8,32], index: 1, kind: input, shape index: {}]
  %s2 = inlined_call_operand.hbm [shape: f32[8,256], index: 2, kind: input, shape index: {}]
  %s3 = inlined_call_operand.hbm [shape: f32[672,256], index: 3, kind: input, shape index: {}]
  %s4 = inlined_call_operand.vmem [shape: f32[8,4], index: 4, kind: output, shape index: {}]
  %s5 = sld [smem:[#allocation0]]
  $region42: #{tpu_custom_call.1} parent=0
    _
  %s7 = ssub.s32 1, %s5
  %s8 = scalar_select 0, %s7, %s5
  $region1: #{tpu_custom_call.1} parent=0
    #allocation2 [shape = 'u8[4096]{0}', space=vmem, size = 0x1000, scoped, tag = 'input window, operand 0, single buffered']
    #allocation3 [shape = 's32[1]{0}', space=sflag, size = 0x4, scoped, tag = 'scoped memory for tpu_custom_call.1']
    #allocation4 [shape = 'u8[4096]{0}', space=vmem, size = 0x1000, scoped, tag = 'input window, operand 1, single buffered']
    #allocation5 [shape = 's32[1]{0}', space=sflag, size = 0x4, scoped, tag = 'scoped memory for tpu_custom_call.1']
    #allocation6 [shape = 'u8[8192]{0}', space=vmem, size = 0x2000, scoped, tag = 'input window, operand 2, single buffered']
    #allocation7 [shape = 'u8[688128]{0}', space=vmem, size = 0xa8000, scoped, tag = 'input window, operand 3, single buffered']
    #allocation8 [shape = 's32[1]{0}', space=sflag, size = 0x4, scoped, tag = 'scoped memory for tpu_custom_call.1']
    %9 = vsyncpa [#allocation3], 0
    %10 = vsyncpa [#allocation5], 0
    %11 = vsyncpa [#allocation8], 0
    // Predicated region
    $region2: #{tpu_custom_call.1} parent=1 // pred_check
      _
    $region3: #{tpu_custom_call.1} parent=1 // pred_check_branch
      %13 = sbr.rel (0) target = $region5
    $region4: #{tpu_custom_call.1} parent=1 // pred_region
      %s15 = ssub.s32 128, 128
      %16 = vsyncadd [#allocation3], %s15
      %s18 = sshll.u32 [#allocation2], 4
      %s19 = int_to_ptr.vmem [resolvable:$true] %s18
      %21 = dma.hbm_to_vmem [thread:$0]  %s0, 128, %s19, [#allocation3]
    $region5: #{tpu_custom_call.1} parent=1 // pred_fallthru
      _
    // Predicated region
    $region6: #{tpu_custom_call.1} parent=1 // pred_check
      _
    $region7: #{tpu_custom_call.1} parent=1 // pred_check_branch
      %23 = sbr.rel (0) target = $region9
    $region8: #{tpu_custom_call.1} parent=1 // pred_region
      %s25 = ssub.s32 128, 128
      %26 = vsyncadd [#allocation5], %s25
      %s28 = sshll.u32 [#allocation4], 4
      %s29 = int_to_ptr.vmem [resolvable:$true] %s28
      %31 = dma.hbm_to_vmem [thread:$0]  %s1, 128, %s29, [#allocation5]
    $region9: #{tpu_custom_call.1} parent=1 // pred_fallthru
      _
    // Predicated region
    $region10: #{tpu_custom_call.1} parent=1 // pred_check
      _
    $region11: #{tpu_custom_call.1} parent=1 // pred_check_branch
      %33 = sbr.rel (0) target = $region13
    $region12: #{tpu_custom_call.1} parent=1 // pred_region
      %s35 = ssub.s32 256, 256
      %36 = vsyncadd [#allocation5], %s35
      %s38 = sshll.u32 [#allocation6], 4
      %s39 = int_to_ptr.vmem [resolvable:$true] %s38
      %41 = dma.hbm_to_vmem [thread:$0]  %s2, 256, %s39, [#allocation5]
    $region13: #{tpu_custom_call.1} parent=1 // pred_fallthru
      _
    // Predicated region
    $region14: #{tpu_custom_call.1} parent=1 // pred_check
      _
    $region15: #{tpu_custom_call.1} parent=1 // pred_check_branch
      %43 = sbr.rel (0) target = $region17
    $region16: #{tpu_custom_call.1} parent=1 // pred_region
      %s45 = ssub.s32 21504, 21504
      %46 = vsyncadd [#allocation8], %s45
      %s47 = sshll.u32 [#allocation7], 4
      %s48 = int_to_ptr.vmem [resolvable:$true] %s47
      %53 = dma.hbm_to_vmem [thread:$0]  %s3, 21504, %s48, [#allocation8], 256, 256, 16
    $region17: #{tpu_custom_call.1} parent=1 // pred_fallthru
      _
    // Predicated region
    $region18: #{tpu_custom_call.1} parent=1 // pred_check
      _
    $region19: #{tpu_custom_call.1} parent=1 // pred_check_branch
      %55 = sbr.rel (0) target = $region21
    $region20: #{tpu_custom_call.1} parent=1 // pred_region
      %56 = dma.done [#allocation3], 128
    $region21: #{tpu_custom_call.1} parent=1 // pred_fallthru
      _
    // Predicated region
    $region22: #{tpu_custom_call.1} parent=1 // pred_check
      _
    $region23: #{tpu_custom_call.1} parent=1 // pred_check_branch
      %58 = sbr.rel (0) target = $region25
    $region24: #{tpu_custom_call.1} parent=1 // pred_region
      %59 = dma.done [#allocation5], 128
    $region25: #{tpu_custom_call.1} parent=1 // pred_fallthru
      _
    // Predicated region
    $region26: #{tpu_custom_call.1} parent=1 // pred_check
      _
    $region27: #{tpu_custom_call.1} parent=1 // pred_check_branch
      %61 = sbr.rel (0) target = $region29
    $region28: #{tpu_custom_call.1} parent=1 // pred_region
      %62 = dma.done [#allocation5], 256
    $region29: #{tpu_custom_call.1} parent=1 // pred_fallthru
      _
    // Predicated region
    $region30: #{tpu_custom_call.1} parent=1 // pred_check
      _
    $region31: #{tpu_custom_call.1} parent=1 // pred_check_branch
      %64 = sbr.rel (0) target = $region33
    $region32: #{tpu_custom_call.1} parent=1 // pred_region
      %65 = dma.done [#allocation8], 21504
    $region33: #{tpu_custom_call.1} parent=1 // pred_fallthru
      _
    %v66 = vld [vmem:[#allocation6] ss:$0 sm:$0xff]
    %v67 = vld [vmem:[#allocation6 + $0x1] ss:$0 sm:$0xff]
    %v68 = vld [vmem:[#allocation6 + $0x2] ss:$0 sm:$0xff]
    %v69 = vld [vmem:[#allocation6 + $0x3] ss:$0 sm:$0xff]
    %s70 = scalar_lea.vmem [#allocation6], 4
    %v71 = vld [vmem:[%s70] ss:$8 sm:$0x3]
    %s72 = scalar_lea.vmem [#allocation6], 5
    %v73 = vld [vmem:[%s72] ss:$8 sm:$0x3]
    %s74 = scalar_lea.vmem [#allocation6], 6
    %v75 = vld [vmem:[%s74] ss:$8 sm:$0x3]
    %v76 = vld [vmem:[#allocation6 + $0x7] ss:$0 sm:$0xff]
    %v77 = vld [vmem:[#allocation2] sm:$0xff]
    %v78 = vld [vmem:[#allocation4] sm:$0xff]
    %v79 = vmul.f32 %v78, %v68
    %v80 = vadd.f32 %v79, %v69
    %v81 = vxor.u32 %v80, 2147483648
    %v82 = vmul.f32 %v81, 1.442695
    %v83 = vpow.pop %v82
    %v84 = vadd.f32 %v83, 1.0
    %v85 = vrcp.pop %v84
    %v86 = vmul.f32 1.0, %v85
    %v87 = vmul.f32 %v77, %v67
    %v88 = vadd.f32 %v66, %v87
    %v89 = vld [vmem:[#allocation7] sm:$0xff]
    %v90 = vld [vmem:[#allocation7 + $0x10] sm:$0xff]
    %v91 = vld [vmem:[#allocation7 + $0x20] sm:$0xff]
    %v92 = vld [vmem:[#allocation7 + $0x30] sm:$0xff]
    %vm93 = vcmask 261120
    %v95 = vsel %vm93, %v86, 0
    %97 = vmatprep.subr.mxu0 0.0
    %98 = vmatpush1.msra.mxu0 %v89
    %99 = vmatprep.subr.mxu0 0.0
    %100 = vmatpush1.msra.mxu0 %v90
    %101 = vmatprep.subr.mxu0 0.0
    %102 = vmatpush1.msra.mxu0 %v91
    %103 = vmatprep.subr.mxu0 0.0
    %104 = vmatpush1.msra.mxu0 %v92
    %105 = vmatprep.subr.mxu0 0.0
    %106 = vmatpush1.msra.mxu0 0.0
    %107 = vmatprep.subr.mxu0 0.0
    %108 = vmatpush1.msra.mxu0 0.0
    %109 = vmatprep.subr.mxu0 0.0
    %110 = vmatpush1.msra.mxu0 0.0
    %111 = vmatprep.subr.mxu0 0.0
    %112 = vmatpush1.msra.mxu0 0.0
    %113 = vmatprep.subr.mxu0 0.0
    %114 = vmatpush1.msra.mxu0 0.0
    %115 = vmatprep.subr.mxu0 0.0
    %116 = vmatpush1.msra.mxu0 0.0
    %117 = vmatprep.subr.mxu0 0.0
    %118 = vmatpush1.msra.mxu0 0.0
    %119 = vmatprep.subr.mxu0 0.0
    %120 = vmatpush1.msra.mxu0 0.0
    %121 = vmatprep.subr.mxu0 0.0
    %122 = vmatpush1.msra.mxu0 0.0
    %123 = vmatprep.subr.mxu0 0.0
    %124 = vmatpush1.msra.mxu0 0.0
    %125 = vmatprep.subr.mxu0 0.0
    %126 = vmatpush1.msra.mxu0 0.0
    %127 = vmatprep.subr.mxu0 0.0
    %128 = vmatpush1.msra.mxu0 0.0
    %129 = vmatprep.subr.mxu0 0.0
    %130 = vmatpush1.msra.mxu0 0.0
    %131 = vmatprep.subr.mxu0 0.0
    %132 = vmatpush1.msra.mxu0 0.0
    %133 = vmatprep.subr.mxu0 0.0
    %134 = vmatpush1.msra.mxu0 0.0
    %135 = vmatprep.subr.mxu0 0.0
    %136 = vmatpush1.msra.mxu0 0.0
    %137 = vmatprep.subr.mxu0 0.0
    %138 = vmatpush1.msra.mxu0 0.0
    %139 = vmatprep.subr.mxu0 0.0
    %140 = vmatpush1.msra.mxu0 0.0
    %141 = vmatprep.subr.mxu0 0.0
    %142 = vmatpush1.msra.mxu0 0.0
    %143 = vmatprep.subr.mxu0 0.0
    %144 = vmatpush1.msra.mxu0 0.0
    %145 = vmatprep.subr.mxu0 0.0
    %146 = vmatpush1.msra.mxu0 0.0
    %147 = vmatprep.subr.mxu0 0.0
    %148 = vmatpush1.msra.mxu0 0.0
    %149 = vmatprep.subr.mxu0 0.0
    %150 = vmatpush1.msra.mxu0 0.0
    %151 = vmatprep.subr.mxu0 0.0
    %152 = vmatpush1.msra.mxu0 0.0
    %153 = vmatprep.subr.mxu0 0.0
    %154 = vmatpush1.msra.mxu0 0.0
    %155 = vmatprep.subr.mxu0 0.0
    %156 = vmatpush1.msra.mxu0 0.0
    %157 = vmatprep.subr.mxu0 0.0
    %158 = vmatpush1.msra.mxu0 0.0
    %159 = vmatprep.subr.mxu0 0.0
    %160 = vmatpush1.msra.mxu0 0.0
    %161 = vmatprep.mubr.f32.mxu0 0.0
    %162 = vmatmul.mubr.f32.gmra.mrb[0].mxu0 %v95
    %v163 = vpop.f32.mrb[0].mxu0
    %v164 = vadd.f32 0.0, %v163
    %v165 = vpop.f32.mrb[0].mxu0
    %166 = vdwg.mxu0
    %v167 = vadd.f32 %v88, %v164
    %v168 = vmax.f32 %v167, 0.0
    %v169 = vld [vmem:[#allocation7 + $0x40] sm:$0xff]
    %v170 = vld [vmem:[#allocation7 + $0x48] sm:$0xff]
    %v171 = vld [vmem:[#allocation7 + $0x50] sm:$0xff]
    %v172 = vld [vmem:[#allocation7 + $0x58] sm:$0xff]
    %v173 = vld [vmem:[#allocation7 + $0x60] sm:$0xff]
    %v174 = vld [vmem:[#allocation7 + $0x68] sm:$0xff]
    %v175 = vld [vmem:[#allocation7 + $0x70] sm:$0xff]
    %v176 = vld [vmem:[#allocation7 + $0x78] sm:$0xff]
    %v177 = vld [vmem:[#allocation7 + $0x80] sm:$0xff]
    %v178 = vld [vmem:[#allocation7 + $0x88] sm:$0xff]
    %v179 = vld [vmem:[#allocation7 + $0x90] sm:$0xff]
    %v180 = vld [vmem:[#allocation7 + $0x98] sm:$0xff]
    %v181 = vld [vmem:[#allocation7 + $0xa0] sm:$0xff]
    %v182 = vld [vmem:[#allocation7 + $0xa8] sm:$0xff]
    %v183 = vld [vmem:[#allocation7 + $0xb0] sm:$0xff]
    %v184 = vld [vmem:[#allocation7 + $0xb8] sm:$0xff]
    %v185 = vld [vmem:[#allocation7 + $0xc0] sm:$0xff]
    %v186 = vld [vmem:[#allocation7 + $0xc8] sm:$0xff]
    %v187 = vld [vmem:[#allocation7 + $0xd0] sm:$0xff]
    %v188 = vld [vmem:[#allocation7 + $0xd8] sm:$0xff]
    %v189 = vld [vmem:[#allocation7 + $0xe0] sm:$0xff]
    %v190 = vld [vmem:[#allocation7 + $0xe8] sm:$0xff]
    %v191 = vld [vmem:[#allocation7 + $0xf0] sm:$0xff]
    %v192 = vld [vmem:[#allocation7 + $0xf8] sm:$0xff]
    %v193 = vld [vmem:[#allocation7 + $0x100] sm:$0xff]
    %v194 = vld [vmem:[#allocation7 + $0x108] sm:$0xff]
    %v195 = vld [vmem:[#allocation7 + $0x110] sm:$0xff]
    %v196 = vld [vmem:[#allocation7 + $0x118] sm:$0xff]
    %v197 = vld [vmem:[#allocation7 + $0x120] sm:$0xff]
    %v198 = vld [vmem:[#allocation7 + $0x128] sm:$0xff]
    %v199 = vld [vmem:[#allocation7 + $0x130] sm:$0xff]
    %v200 = vld [vmem:[#allocation7 + $0x138] sm:$0xff]
    %v202 = vlaneseq
    %v203 = vshrl.u32 %v202, 7
    %v204 = vsub.s32 0, %v203
    %v205 = vrot.slane %v71, %v204
    %v206 = vlaneseq
    %v207 = vshrl.u32 %v206, 7
    %v208 = vsub.s32 1, %v207
    %v209 = vrot.slane %v71, %v208
    %212 = vmatprep.subr.mxu0 %v170
    %213 = vmatpush1.msra.mxu0 %v169
    %214 = vmatprep.subr.mxu0 %v172
    %215 = vmatpush1.msra.mxu0 %v171
    %216 = vmatprep.subr.mxu0 %v174
    %217 = vmatpush1.msra.mxu0 %v173
    %218 = vmatprep.subr.mxu0 %v176
    %219 = vmatpush1.msra.mxu0 %v175
    %220 = vmatprep.subr.mxu0 %v178
    %221 = vmatpush1.msra.mxu0 %v177
    %222 = vmatprep.subr.mxu0 %v180
    %223 = vmatpush1.msra.mxu0 %v179
    %224 = vmatprep.subr.mxu0 %v182
    %225 = vmatpush1.msra.mxu0 %v181
    %226 = vmatprep.subr.mxu0 %v184
    %227 = vmatpush1.msra.mxu0 %v183
    %228 = vmatprep.subr.mxu0 %v186
    %229 = vmatpush1.msra.mxu0 %v185
    %230 = vmatprep.subr.mxu0 %v188
    %231 = vmatpush1.msra.mxu0 %v187
    %232 = vmatprep.subr.mxu0 %v190
    %233 = vmatpush1.msra.mxu0 %v189
    %234 = vmatprep.subr.mxu0 %v192
    %235 = vmatpush1.msra.mxu0 %v191
    %236 = vmatprep.subr.mxu0 %v194
    %237 = vmatpush1.msra.mxu0 %v193
    %238 = vmatprep.subr.mxu0 %v196
    %239 = vmatpush1.msra.mxu0 %v195
    %240 = vmatprep.subr.mxu0 %v198
    %241 = vmatpush1.msra.mxu0 %v197
    %242 = vmatprep.subr.mxu0 %v200
    %243 = vmatpush1.msra.mxu0 %v199
    %244 = vmatprep.subr.mxu0 0.0
    %245 = vmatpush1.msra.mxu0 0.0
    %246 = vmatprep.subr.mxu0 0.0
    %247 = vmatpush1.msra.mxu0 0.0
    %248 = vmatprep.subr.mxu0 0.0
    %249 = vmatpush1.msra.mxu0 0.0
    %250 = vmatprep.subr.mxu0 0.0
    %251 = vmatpush1.msra.mxu0 0.0
    %252 = vmatprep.subr.mxu0 0.0
    %253 = vmatpush1.msra.mxu0 0.0
    %254 = vmatprep.subr.mxu0 0.0
    %255 = vmatpush1.msra.mxu0 0.0
    %256 = vmatprep.subr.mxu0 0.0
    %257 = vmatpush1.msra.mxu0 0.0
    %258 = vmatprep.subr.mxu0 0.0
    %259 = vmatpush1.msra.mxu0 0.0
    %260 = vmatprep.subr.mxu0 0.0
    %261 = vmatpush1.msra.mxu0 0.0
    %262 = vmatprep.subr.mxu0 0.0
    %263 = vmatpush1.msra.mxu0 0.0
    %264 = vmatprep.subr.mxu0 0.0
    %265 = vmatpush1.msra.mxu0 0.0
    %266 = vmatprep.subr.mxu0 0.0
    %267 = vmatpush1.msra.mxu0 0.0
    %268 = vmatprep.subr.mxu0 0.0
    %269 = vmatpush1.msra.mxu0 0.0
    %270 = vmatprep.subr.mxu0 0.0
    %271 = vmatpush1.msra.mxu0 0.0
    %272 = vmatprep.subr.mxu0 0.0
    %273 = vmatpush1.msra.mxu0 0.0
    %274 = vmatprep.subr.mxu0 0.0
    %275 = vmatpush1.msra.mxu0 0.0
    %276 = vmatprep.mubr.f32.mxu0 0.0
    %277 = vmatmul.mubr.f32.gmra.mrb[0].mxu0 %v168
    %v278 = vpop.f32.mrb[0].mxu0
    %v279 = vadd.f32 %v205, %v278
    %v280 = vpop.f32.mrb[0].mxu0
    %v281 = vadd.f32 %v209, %v280
    %282 = vdwg.mxu0
    %v283 = vmax.f32 %v279, 0.0
    %v284 = vmax.f32 %v281, 0.0
    %v286 = vlaneseq
    %v287 = vshrl.u32 %v286, 7
    %v288 = vsub.s32 0, %v287
    %v289 = vrot.slane %v73, %v288
    %v290 = vlaneseq
    %v291 = vshrl.u32 %v290, 7
    %v292 = vsub.s32 1, %v291
    %v293 = vrot.slane %v73, %v292
    %v296 = vmul.f32 %v283, %v289
    %v297 = vmul.f32 %v284, %v293
    %v298 = vld [vmem:[#allocation7 + $0x140] sm:$0xff]
    %v299 = vld [vmem:[#allocation7 + $0x148] sm:$0xff]
    %v300 = vld [vmem:[#allocation7 + $0x150] sm:$0xff]
    %v301 = vld [vmem:[#allocation7 + $0x158] sm:$0xff]
    %v302 = vld [vmem:[#allocation7 + $0x160] sm:$0xff]
    %v303 = vld [vmem:[#allocation7 + $0x168] sm:$0xff]
    %v304 = vld [vmem:[#allocation7 + $0x170] sm:$0xff]
    %v305 = vld [vmem:[#allocation7 + $0x178] sm:$0xff]
    %v306 = vld [vmem:[#allocation7 + $0x180] sm:$0xff]
    %v307 = vld [vmem:[#allocation7 + $0x188] sm:$0xff]
    %v308 = vld [vmem:[#allocation7 + $0x190] sm:$0xff]
    %v309 = vld [vmem:[#allocation7 + $0x198] sm:$0xff]
    %v310 = vld [vmem:[#allocation7 + $0x1a0] sm:$0xff]
    %v311 = vld [vmem:[#allocation7 + $0x1a8] sm:$0xff]
    %v312 = vld [vmem:[#allocation7 + $0x1b0] sm:$0xff]
    %v313 = vld [vmem:[#allocation7 + $0x1b8] sm:$0xff]
    %v314 = vld [vmem:[#allocation7 + $0x1c0] sm:$0xff]
    %v315 = vld [vmem:[#allocation7 + $0x1c8] sm:$0xff]
    %v316 = vld [vmem:[#allocation7 + $0x1d0] sm:$0xff]
    %v317 = vld [vmem:[#allocation7 + $0x1d8] sm:$0xff]
    %v318 = vld [vmem:[#allocation7 + $0x1e0] sm:$0xff]
    %v319 = vld [vmem:[#allocation7 + $0x1e8] sm:$0xff]
    %v320 = vld [vmem:[#allocation7 + $0x1f0] sm:$0xff]
    %v321 = vld [vmem:[#allocation7 + $0x1f8] sm:$0xff]
    %v322 = vld [vmem:[#allocation7 + $0x200] sm:$0xff]
    %v323 = vld [vmem:[#allocation7 + $0x208] sm:$0xff]
    %v324 = vld [vmem:[#allocation7 + $0x210] sm:$0xff]
    %v325 = vld [vmem:[#allocation7 + $0x218] sm:$0xff]
    %v326 = vld [vmem:[#allocation7 + $0x220] sm:$0xff]
    %v327 = vld [vmem:[#allocation7 + $0x228] sm:$0xff]
    %v328 = vld [vmem:[#allocation7 + $0x230] sm:$0xff]
    %v329 = vld [vmem:[#allocation7 + $0x238] sm:$0xff]
    %v330 = vld [vmem:[#allocation7 + $0x240] sm:$0xff]
    %v331 = vld [vmem:[#allocation7 + $0x248] sm:$0xff]
    %v332 = vld [vmem:[#allocation7 + $0x250] sm:$0xff]
    %v333 = vld [vmem:[#allocation7 + $0x258] sm:$0xff]
    %v334 = vld [vmem:[#allocation7 + $0x260] sm:$0xff]
    %v335 = vld [vmem:[#allocation7 + $0x268] sm:$0xff]
    %v336 = vld [vmem:[#allocation7 + $0x270] sm:$0xff]
    %v337 = vld [vmem:[#allocation7 + $0x278] sm:$0xff]
    %v338 = vld [vmem:[#allocation7 + $0x280] sm:$0xff]
    %v339 = vld [vmem:[#allocation7 + $0x288] sm:$0xff]
    %v340 = vld [vmem:[#allocation7 + $0x290] sm:$0xff]
    %v341 = vld [vmem:[#allocation7 + $0x298] sm:$0xff]
    %v342 = vld [vmem:[#allocation7 + $0x2a0] sm:$0xff]
    %v343 = vld [vmem:[#allocation7 + $0x2a8] sm:$0xff]
    %v344 = vld [vmem:[#allocation7 + $0x2b0] sm:$0xff]
    %v345 = vld [vmem:[#allocation7 + $0x2b8] sm:$0xff]
    %v346 = vld [vmem:[#allocation7 + $0x2c0] sm:$0xff]
    %v347 = vld [vmem:[#allocation7 + $0x2c8] sm:$0xff]
    %v348 = vld [vmem:[#allocation7 + $0x2d0] sm:$0xff]
    %v349 = vld [vmem:[#allocation7 + $0x2d8] sm:$0xff]
    %v350 = vld [vmem:[#allocation7 + $0x2e0] sm:$0xff]
    %v351 = vld [vmem:[#allocation7 + $0x2e8] sm:$0xff]
    %v352 = vld [vmem:[#allocation7 + $0x2f0] sm:$0xff]
    %v353 = vld [vmem:[#allocation7 + $0x2f8] sm:$0xff]
    %v354 = vld [vmem:[#allocation7 + $0x300] sm:$0xff]
    %v355 = vld [vmem:[#allocation7 + $0x308] sm:$0xff]
    %v356 = vld [vmem:[#allocation7 + $0x310] sm:$0xff]
    %v357 = vld [vmem:[#allocation7 + $0x318] sm:$0xff]
    %v358 = vld [vmem:[#allocation7 + $0x320] sm:$0xff]
    %v359 = vld [vmem:[#allocation7 + $0x328] sm:$0xff]
    %v360 = vld [vmem:[#allocation7 + $0x330] sm:$0xff]
    %v361 = vld [vmem:[#allocation7 + $0x338] sm:$0xff]
    %v363 = vlaneseq
    %v364 = vshrl.u32 %v363, 7
    %v365 = vsub.s32 0, %v364
    %v366 = vrot.slane %v75, %v365
    %v367 = vlaneseq
    %v368 = vshrl.u32 %v367, 7
    %v369 = vsub.s32 1, %v368
    %v370 = vrot.slane %v75, %v369
    %373 = vmatprep.subr.mxu0 %v299
    %374 = vmatpush1.msra.mxu0 %v298
    %375 = vmatprep.subr.mxu0 %v301
    %376 = vmatpush1.msra.mxu0 %v300
    %377 = vmatprep.subr.mxu0 %v303
    %378 = vmatpush1.msra.mxu0 %v302
    %379 = vmatprep.subr.mxu0 %v305
    %380 = vmatpush1.msra.mxu0 %v304
    %381 = vmatprep.subr.mxu0 %v307
    %382 = vmatpush1.msra.mxu0 %v306
    %383 = vmatprep.subr.mxu0 %v309
    %384 = vmatpush1.msra.mxu0 %v308
    %385 = vmatprep.subr.mxu0 %v311
    %386 = vmatpush1.msra.mxu0 %v310
    %387 = vmatprep.subr.mxu0 %v313
    %388 = vmatpush1.msra.mxu0 %v312
    %389 = vmatprep.subr.mxu0 %v315
    %390 = vmatpush1.msra.mxu0 %v314
    %391 = vmatprep.subr.mxu0 %v317
    %392 = vmatpush1.msra.mxu0 %v316
    %393 = vmatprep.subr.mxu0 %v319
    %394 = vmatpush1.msra.mxu0 %v318
    %395 = vmatprep.subr.mxu0 %v321
    %396 = vmatpush1.msra.mxu0 %v320
    %397 = vmatprep.subr.mxu0 %v323
    %398 = vmatpush1.msra.mxu0 %v322
    %399 = vmatprep.subr.mxu0 %v325
    %400 = vmatpush1.msra.mxu0 %v324
    %401 = vmatprep.subr.mxu0 %v327
    %402 = vmatpush1.msra.mxu0 %v326
    %403 = vmatprep.subr.mxu0 %v329
    %404 = vmatpush1.msra.mxu0 %v328
    %405 = vmatprep.subr.mxu0 %v331
    %406 = vmatpush1.msra.mxu0 %v330
    %407 = vmatprep.subr.mxu0 %v333
    %408 = vmatpush1.msra.mxu0 %v332
    %409 = vmatprep.subr.mxu0 %v335
    %410 = vmatpush1.msra.mxu0 %v334
    %411 = vmatprep.subr.mxu0 %v337
    %412 = vmatpush1.msra.mxu0 %v336
    %413 = vmatprep.subr.mxu0 %v339
    %414 = vmatpush1.msra.mxu0 %v338
    %415 = vmatprep.subr.mxu0 %v341
    %416 = vmatpush1.msra.mxu0 %v340
    %417 = vmatprep.subr.mxu0 %v343
    %418 = vmatpush1.msra.mxu0 %v342
    %419 = vmatprep.subr.mxu0 %v345
    %420 = vmatpush1.msra.mxu0 %v344
    %421 = vmatprep.subr.mxu0 %v347
    %422 = vmatpush1.msra.mxu0 %v346
    %423 = vmatprep.subr.mxu0 %v349
    %424 = vmatpush1.msra.mxu0 %v348
    %425 = vmatprep.subr.mxu0 %v351
    %426 = vmatpush1.msra.mxu0 %v350
    %427 = vmatprep.subr.mxu0 %v353
    %428 = vmatpush1.msra.mxu0 %v352
    %429 = vmatprep.subr.mxu0 %v355
    %430 = vmatpush1.msra.mxu0 %v354
    %431 = vmatprep.subr.mxu0 %v357
    %432 = vmatpush1.msra.mxu0 %v356
    %433 = vmatprep.subr.mxu0 %v359
    %434 = vmatpush1.msra.mxu0 %v358
    %435 = vmatprep.subr.mxu0 %v361
    %436 = vmatpush1.msra.mxu0 %v360
    %437 = vmatprep.mubr.f32.mxu0 %v297
    %438 = vmatmul.mubr.f32.gmra.mrb[0].mxu0 %v296
    %v439 = vpop.f32.mrb[0].mxu0
    %v440 = vadd.f32 %v366, %v439
    %v441 = vpop.f32.mrb[0].mxu0
    %v442 = vadd.f32 %v370, %v441
    %443 = vdwg.mxu0
    %v444 = vmax.f32 %v440, 0.0
    %v445 = vmax.f32 %v442, 0.0
    %v446 = vld [vmem:[#allocation7 + $0x340] sm:$0xff]
    %v447 = vld [vmem:[#allocation7 + $0x350] sm:$0xff]
    %v448 = vld [vmem:[#allocation7 + $0x360] sm:$0xff]
    %v449 = vld [vmem:[#allocation7 + $0x370] sm:$0xff]
    %v450 = vld [vmem:[#allocation7 + $0x380] sm:$0xff]
    %v451 = vld [vmem:[#allocation7 + $0x390] sm:$0xff]
    %v452 = vld [vmem:[#allocation7 + $0x3a0] sm:$0xff]
    %v453 = vld [vmem:[#allocation7 + $0x3b0] sm:$0xff]
    %v454 = vld [vmem:[#allocation7 + $0x3c0] sm:$0xff]
    %v455 = vld [vmem:[#allocation7 + $0x3d0] sm:$0xff]
    %v456 = vld [vmem:[#allocation7 + $0x3e0] sm:$0xff]
    %v457 = vld [vmem:[#allocation7 + $0x3f0] sm:$0xff]
    %v458 = vld [vmem:[#allocation7 + $0x400] sm:$0xff]
    %v459 = vld [vmem:[#allocation7 + $0x410] sm:$0xff]
    %v460 = vld [vmem:[#allocation7 + $0x420] sm:$0xff]
    %v461 = vld [vmem:[#allocation7 + $0x430] sm:$0xff]
    %v462 = vld [vmem:[#allocation7 + $0x440] sm:$0xff]
    %v463 = vld [vmem:[#allocation7 + $0x450] sm:$0xff]
    %v464 = vld [vmem:[#allocation7 + $0x460] sm:$0xff]
    %v465 = vld [vmem:[#allocation7 + $0x470] sm:$0xff]
    %v466 = vld [vmem:[#allocation7 + $0x480] sm:$0xff]
    %v467 = vld [vmem:[#allocation7 + $0x490] sm:$0xff]
    %v468 = vld [vmem:[#allocation7 + $0x4a0] sm:$0xff]
    %v469 = vld [vmem:[#allocation7 + $0x4b0] sm:$0xff]
    %v470 = vld [vmem:[#allocation7 + $0x4c0] sm:$0xff]
    %v471 = vld [vmem:[#allocation7 + $0x4d0] sm:$0xff]
    %v472 = vld [vmem:[#allocation7 + $0x4e0] sm:$0xff]
    %v473 = vld [vmem:[#allocation7 + $0x4f0] sm:$0xff]
    %v474 = vld [vmem:[#allocation7 + $0x500] sm:$0xff]
    %v475 = vld [vmem:[#allocation7 + $0x510] sm:$0xff]
    %v476 = vld [vmem:[#allocation7 + $0x520] sm:$0xff]
    %v477 = vld [vmem:[#allocation7 + $0x530] sm:$0xff]
    %478 = vmatprep.subr.mxu0 0.0
    %479 = vmatpush1.msra.mxu0 %v446
    %480 = vmatprep.subr.mxu0 0.0
    %481 = vmatpush1.msra.mxu0 %v447
    %482 = vmatprep.subr.mxu0 0.0
    %483 = vmatpush1.msra.mxu0 %v448
    %484 = vmatprep.subr.mxu0 0.0
    %485 = vmatpush1.msra.mxu0 %v449
    %486 = vmatprep.subr.mxu0 0.0
    %487 = vmatpush1.msra.mxu0 %v450
    %488 = vmatprep.subr.mxu0 0.0
    %489 = vmatpush1.msra.mxu0 %v451
    %490 = vmatprep.subr.mxu0 0.0
    %491 = vmatpush1.msra.mxu0 %v452
    %492 = vmatprep.subr.mxu0 0.0
    %493 = vmatpush1.msra.mxu0 %v453
    %494 = vmatprep.subr.mxu0 0.0
    %495 = vmatpush1.msra.mxu0 %v454
    %496 = vmatprep.subr.mxu0 0.0
    %497 = vmatpush1.msra.mxu0 %v455
    %498 = vmatprep.subr.mxu0 0.0
    %499 = vmatpush1.msra.mxu0 %v456
    %500 = vmatprep.subr.mxu0 0.0
    %501 = vmatpush1.msra.mxu0 %v457
    %502 = vmatprep.subr.mxu0 0.0
    %503 = vmatpush1.msra.mxu0 %v458
    %504 = vmatprep.subr.mxu0 0.0
    %505 = vmatpush1.msra.mxu0 %v459
    %506 = vmatprep.subr.mxu0 0.0
    %507 = vmatpush1.msra.mxu0 %v460
    %508 = vmatprep.subr.mxu0 0.0
    %509 = vmatpush1.msra.mxu0 %v461
    %510 = vmatprep.subr.mxu0 0.0
    %511 = vmatpush1.msra.mxu0 %v462
    %512 = vmatprep.subr.mxu0 0.0
    %513 = vmatpush1.msra.mxu0 %v463
    %514 = vmatprep.subr.mxu0 0.0
    %515 = vmatpush1.msra.mxu0 %v464
    %516 = vmatprep.subr.mxu0 0.0
    %517 = vmatpush1.msra.mxu0 %v465
    %518 = vmatprep.subr.mxu0 0.0
    %519 = vmatpush1.msra.mxu0 %v466
    %520 = vmatprep.subr.mxu0 0.0
    %521 = vmatpush1.msra.mxu0 %v467
    %522 = vmatprep.subr.mxu0 0.0
    %523 = vmatpush1.msra.mxu0 %v468
    %524 = vmatprep.subr.mxu0 0.0
    %525 = vmatpush1.msra.mxu0 %v469
    %526 = vmatprep.subr.mxu0 0.0
    %527 = vmatpush1.msra.mxu0 %v470
    %528 = vmatprep.subr.mxu0 0.0
    %529 = vmatpush1.msra.mxu0 %v471
    %530 = vmatprep.subr.mxu0 0.0
    %531 = vmatpush1.msra.mxu0 %v472
    %532 = vmatprep.subr.mxu0 0.0
    %533 = vmatpush1.msra.mxu0 %v473
    %534 = vmatprep.subr.mxu0 0.0
    %535 = vmatpush1.msra.mxu0 %v474
    %536 = vmatprep.subr.mxu0 0.0
    %537 = vmatpush1.msra.mxu0 %v475
    %538 = vmatprep.subr.mxu0 0.0
    %539 = vmatpush1.msra.mxu0 %v476
    %540 = vmatprep.subr.mxu0 0.0
    %541 = vmatpush1.msra.mxu0 %v477
    %542 = vmatprep.mubr.f32.mxu0 %v445
    %543 = vmatmul.mubr.f32.gmra.mrb[0].mxu0 %v444
    %v544 = vpop.f32.mrb[0].mxu0
    %v545 = vadd.f32 %v76, %v544
    %v546 = vpop.f32.mrb[0].mxu0
    %547 = vdwg.mxu0
    %vm548 = vcmask 31744
    %549 = vst.msk [vmem:[%s4] sm:$0xff] %vm548, %v545
    // Predicated region
    $region34: #{tpu_custom_call.1} parent=1 // pred_check
      _
    $region35: #{tpu_custom_call.1} parent=1 // pred_check_branch
      %551 = sbr.rel (0) target = $region37
    $region36: #{tpu_custom_call.1} parent=1 // pred_region
      _
    $region37: #{tpu_custom_call.1} parent=1 // pred_fallthru
      _
    // Predicated region
    $region38: #{tpu_custom_call.1} parent=1 // pred_check
      _
    $region39: #{tpu_custom_call.1} parent=1 // pred_check_branch
      %553 = sbr.rel (0) target = $region41
    $region40: #{tpu_custom_call.1} parent=1 // pred_region
      _
    $region41: #{tpu_custom_call.1} parent=1 // pred_fallthru
      _
    %554 = vsyncpa [#allocation3], 1
    %555 = vsyncpa [#allocation5], 1
    %556 = vsyncpa [#allocation8], 1

</llo_original>
